<compile_context>
chip_gen: v6e
topology: v6e:2x2x1
jax: 0.10.0
libtpu: 0.0.40
codegen_flags: <defaults>
</compile_context>

<pallas_src>
import math

import jax
import jax.numpy as jnp
from jax.experimental import pallas as pl
from jax.experimental.pallas import tpu as pltpu


def calculate_laplacian_with_self_loop(matrix: jnp.ndarray) -> jnp.ndarray:
    """JAX port of the PyTorch helper (glue, runs outside the kernel)."""
    n = matrix.shape[0]
    matrix = matrix + jnp.eye(n, dtype=matrix.dtype)
    row_sum = matrix.sum(axis=1)
    d_inv_sqrt = jnp.power(row_sum, -0.5).reshape(-1)
    d_inv_sqrt = jnp.where(jnp.isinf(d_inv_sqrt), 0.0, d_inv_sqrt)
    d_mat_inv_sqrt = jnp.diag(d_inv_sqrt)
    return (matrix @ d_mat_inv_sqrt).T @ d_mat_inv_sqrt


def _round_up(x: int, m: int) -> int:
    return (x + m - 1) // m * m


def _pick_row_tile(n_pad: int) -> int:
    for t in (512, 256, 128):
        if n_pad % t == 0:
            return t
    return 128


def _gcn_spmm_kernel(lap_ref, x_ref, o_ref):
    # o[b, i_tile, :] += lap[i_tile, k_tile] @ x[b, k_tile, :]
    k = pl.program_id(2)

    @pl.when(k == 0)
    def _init():
        o_ref[...] = jnp.zeros_like(o_ref)

    lap_t = lap_ref[...]                       # (t, t) bf16, fetched once per (i,k)
    for b in range(x_ref.shape[0]):            # static batch-tile loop (<= 8)
        o_ref[b] += jnp.dot(lap_t, x_ref[b], preferred_element_type=jnp.float32)


def gcn_spmm(laplacian_bf16: jnp.ndarray, x: jnp.ndarray, *, max_batch_tile: int = 8):
    """out[b, n, f] = sum_k laplacian[n, k] * x[b, k, f]  (f32 accumulation)."""
    b, n, f = x.shape
    f_pad = _round_up(f, 128)                  # lane-dense output tiles
    n_pad = _round_up(n, 128)
    t = _pick_row_tile(n_pad)                  # row / contraction tile
    bt = min(b, max_batch_tile)                # batch tile (reuses lap tile bt times)
    b_pad = _round_up(b, bt)

    lap = laplacian_bf16
    if n_pad != n:
        lap = jnp.pad(lap, ((0, n_pad - n), (0, n_pad - n)))
    xb = x.astype(jnp.bfloat16)
    if (b_pad, n_pad, f_pad) != (b, n, f):
        xb = jnp.pad(xb, ((0, b_pad - b), (0, n_pad - n), (0, f_pad - f)))

    grid = (b_pad // bt, n_pad // t, n_pad // t)   # (batch tile, row tile, k tile)

    cost = pl.CostEstimate(
        flops=2 * b_pad * n_pad * n_pad * f_pad,
        transcendentals=0,
        bytes_accessed=int(
            lap.size * 2                        # laplacian read once
            + xb.size * 2 * (n_pad // t)        # x re-read once per row tile
            + b_pad * n_pad * f_pad * 4         # f32 output
        ),
    )

    out = pl.pallas_call(
        _gcn_spmm_kernel,
        out_shape=jax.ShapeDtypeStruct((b_pad, n_pad, f_pad), jnp.float32),
        grid_spec=pltpu.PrefetchScalarGridSpec(
            num_scalar_prefetch=0,
            grid=grid,
            in_specs=[
                pl.BlockSpec((t, t), lambda bi, i, k: (i, k)),
                pl.BlockSpec((bt, t, f_pad), lambda bi, i, k: (bi, k, 0)),
            ],
            out_specs=pl.BlockSpec((bt, t, f_pad), lambda bi, i, k: (bi, i, 0)),
        ),
        compiler_params=pltpu.CompilerParams(
            dimension_semantics=("parallel", "parallel", "arbitrary"),
            vmem_limit_bytes=32 * 1024 * 1024,
        ),
        cost_estimate=cost,
    )(lap, xb)

    if (b_pad, n_pad, f_pad) != (b, n, f):
        out = out[:b, :n, :f]
    return out


# Below this many activation elements the Pallas launch / DMA overhead
# dominates the handful of FLOPs; use a plain XLA einsum instead.
_PALLAS_MIN_ELEMENTS = 8192


class GCN:
    """Mirror of the PyTorch GCN module (forward only uses the laplacian)."""

    def __init__(self, adj, input_dim, input_size, hidden, key):
        self.laplacian = calculate_laplacian_with_self_loop(
            jnp.asarray(adj, dtype=jnp.float32)
        )
        # Constant buffer: cast once to bf16 for the MXU (f32 accumulate).
        self._laplacian_bf16 = self.laplacian.astype(jnp.bfloat16)
        self._num_nodes = adj.shape[0]
        self.input_dim = input_dim
        self.feature_dim = input_size
        self.out_dim = hidden
        # xavier_uniform with tanh gain (5/3); unused by forward (parity only).
        gain = 5.0 / 3.0
        bound = gain * math.sqrt(6.0 / (self.input_dim + self.out_dim))
        self.weights = jax.random.uniform(
            key, (self.input_dim, self.out_dim),
            minval=-bound, maxval=bound, dtype=jnp.float32,
        )

    def forward(self, x):
        # x: (batch, num_nodes, feature_dim) -> (batch, num_nodes, feature_dim)
        batch, n, f = x.shape
        if batch * n * f < _PALLAS_MIN_ELEMENTS or n < 8:
            # Tiny graph: skip the standalone kernel, let XLA fuse the matmul.
            return jnp.einsum('nk,bkf->bnf', self.laplacian, x)
        return gcn_spmm(self._laplacian_bf16, x)


if __name__ == "__main__":
    key = jax.random.PRNGKey(0)
    k_adj, k_x, k_w = jax.random.split(key, 3)

    batch = 2
    num_nodes = 128       # aligned to 128 lanes / MXU width
    feature_dim = 128
    hidden = 32

    # Deterministic synthetic adjacency (symmetric, non-negative) and input.
    adj_raw = jax.random.uniform(k_adj, (num_nodes, num_nodes), dtype=jnp.float32)
    adj = (adj_raw + adj_raw.T) * 0.5

    x = jax.random.normal(k_x, (batch, num_nodes, feature_dim), dtype=jnp.float32)

    model = GCN(adj, input_dim=feature_dim, input_size=feature_dim,
                hidden=hidden, key=k_w)

    out = jax.block_until_ready(model.forward(x))   # Pallas path at this shape

    # Reference in plain f32 JAX (PyTorch-equivalent math).
    ref = jnp.einsum('nk,bkf->bnf', model.laplacian, x)

    assert out.shape == (batch, num_nodes, feature_dim)
    # bf16 MXU operands (f32 accumulation) -> looser tolerance than pure f32.
    assert jnp.allclose(out, ref, atol=1e-2, rtol=1e-2), float(
        jnp.max(jnp.abs(out - ref))
    )

    print("KERNEL_OK")
</pallas_src>

<mosaic_0001>
module attributes {stable_mosaic.version = 11 : i64} {
  func.func @_gcn_spmm_kernel(%arg0: i32, %arg1: i32, %arg2: i32, %arg3: memref<128x128xbf16, #tpu.memory_space<vmem>>, %arg4: memref<2x128x128xbf16, #tpu.memory_space<vmem>>, %arg5: memref<2x128x128xf32, #tpu.memory_space<vmem>>) attributes {dimension_semantics = [#tpu.dimension_semantics<parallel>, #tpu.dimension_semantics<parallel>, #tpu.dimension_semantics<arbitrary>], iteration_bounds = array<i64: 1, 1, 1>, scalar_prefetch = 0 : i64, scratch_operands = 0 : i64, tpu.core_type = #tpu.core_type<tc>, window_params = [{transform_indices = @transform_0, window_bounds = array<i64: 128, 128>}, {transform_indices = @transform_1, window_bounds = array<i64: 2, 128, 128>}, {transform_indices = @transform_2, window_bounds = array<i64: 2, 128, 128>}]} {
    %c0_i32 = arith.constant 0 : i32
    %0 = arith.cmpi eq, %arg2, %c0_i32 : i32
    %1 = arith.extui %0 : i1 to i32
    %c0_i32_0 = arith.constant 0 : i32
    %2 = arith.cmpi ne, %1, %c0_i32_0 : i32
    scf.if %2 {
      %cst_20 = arith.constant 0.000000e+00 : f32
      %22 = vector.broadcast %cst_20 : f32 to vector<2x128x128xf32>
      %c0_21 = arith.constant 0 : index
      %c0_22 = arith.constant 0 : index
      %c0_23 = arith.constant 0 : index
      %23 = vector.load %arg5[%c0_21, %c0_22, %c0_23] : memref<2x128x128xf32, #tpu.memory_space<vmem>>, vector<2x128x128xf32>
      tpu.vector_store %arg5[%c0_21, %c0_22, %c0_23], %22 {strides = array<i32>} : memref<2x128x128xf32, #tpu.memory_space<vmem>>, vector<2x128x128xf32>,
    } else {
    }
    %c0 = arith.constant 0 : index
    %c0_1 = arith.constant 0 : index
    %3 = vector.load %arg3[%c0, %c0_1] : memref<128x128xbf16, #tpu.memory_space<vmem>>, vector<128x128xbf16>
    %c0_2 = arith.constant 0 : index
    %c0_3 = arith.constant 0 : index
    %c0_4 = arith.constant 0 : index
    %4 = vector.load %arg5[%c0_2, %c0_3, %c0_4] : memref<2x128x128xf32, #tpu.memory_space<vmem>>, vector<1x128x128xf32>
    %5 = vector.shape_cast %4 : vector<1x128x128xf32> to vector<128x128xf32>
    %c0_5 = arith.constant 0 : index
    %c0_6 = arith.constant 0 : index
    %c0_7 = arith.constant 0 : index
    %6 = vector.load %arg4[%c0_5, %c0_6, %c0_7] : memref<2x128x128xbf16, #tpu.memory_space<vmem>>, vector<1x128x128xbf16>
    %7 = vector.shape_cast %6 : vector<1x128x128xbf16> to vector<128x128xbf16>
    %cst = arith.constant dense<0.000000e+00> : vector<128x128xf32>
    %8 = tpu.matmul %3, %7, %cst {dimension_numbers = #tpu.dot_dimension_numbers<[1], [0], [0], [1], [0, 0, 1, 1], [], []>} : vector<128x128xbf16>, vector<128x128xbf16>, vector<128x128xf32> -> vector<128x128xf32>
    %9 = arith.addf %5, %8 : vector<128x128xf32>
    %c0_8 = arith.constant 0 : index
    %c0_9 = arith.constant 0 : index
    %c0_10 = arith.constant 0 : index
    %10 = vector.load %arg5[%c0_8, %c0_9, %c0_10] : memref<2x128x128xf32, #tpu.memory_space<vmem>>, vector<1x128x128xf32>
    %11 = vector.shape_cast %10 : vector<1x128x128xf32> to vector<128x128xf32>
    %12 = vector.shape_cast %9 : vector<128x128xf32> to vector<1x128x128xf32>
    tpu.vector_store %arg5[%c0_8, %c0_9, %c0_10], %12 {strides = array<i32>} : memref<2x128x128xf32, #tpu.memory_space<vmem>>, vector<1x128x128xf32>,
    %c1 = arith.constant 1 : index
    %c0_11 = arith.constant 0 : index
    %c0_12 = arith.constant 0 : index
    %13 = vector.load %arg5[%c1, %c0_11, %c0_12] : memref<2x128x128xf32, #tpu.memory_space<vmem>>, vector<1x128x128xf32>
    %14 = vector.shape_cast %13 : vector<1x128x128xf32> to vector<128x128xf32>
    %c1_13 = arith.constant 1 : index
    %c0_14 = arith.constant 0 : index
    %c0_15 = arith.constant 0 : index
    %15 = vector.load %arg4[%c1_13, %c0_14, %c0_15] : memref<2x128x128xbf16, #tpu.memory_space<vmem>>, vector<1x128x128xbf16>
    %16 = vector.shape_cast %15 : vector<1x128x128xbf16> to vector<128x128xbf16>
    %cst_16 = arith.constant dense<0.000000e+00> : vector<128x128xf32>
    %17 = tpu.matmul %3, %16, %cst_16 {dimension_numbers = #tpu.dot_dimension_numbers<[1], [0], [0], [1], [0, 0, 1, 1], [], []>} : vector<128x128xbf16>, vector<128x128xbf16>, vector<128x128xf32> -> vector<128x128xf32>
    %18 = arith.addf %14, %17 : vector<128x128xf32>
    %c1_17 = arith.constant 1 : index
    %c0_18 = arith.constant 0 : index
    %c0_19 = arith.constant 0 : index
    %19 = vector.load %arg5[%c1_17, %c0_18, %c0_19] : memref<2x128x128xf32, #tpu.memory_space<vmem>>, vector<1x128x128xf32>
    %20 = vector.shape_cast %19 : vector<1x128x128xf32> to vector<128x128xf32>
    %21 = vector.shape_cast %18 : vector<128x128xf32> to vector<1x128x128xf32>
    tpu.vector_store %arg5[%c1_17, %c0_18, %c0_19], %21 {strides = array<i32>} : memref<2x128x128xf32, #tpu.memory_space<vmem>>, vector<1x128x128xf32>,
    return
  }
  func.func @transform_0(%arg0: i32, %arg1: i32, %arg2: i32) -> (i32, i32) {
    %c0_i32 = arith.constant 0 : i32
    return %arg1, %arg2 : i32, i32
  }
  func.func @transform_1(%arg0: i32, %arg1: i32, %arg2: i32) -> (i32, i32, i32) {
    %c0_i32 = arith.constant 0 : i32
    %c0_i32_0 = arith.constant 0 : i32
    return %arg0, %arg2, %c0_i32 : i32, i32, i32
  }
  func.func @transform_2(%arg0: i32, %arg1: i32, %arg2: i32) -> (i32, i32, i32) {
    %c0_i32 = arith.constant 0 : i32
    %c0_i32_0 = arith.constant 0 : i32
    return %arg0, %arg1, %c0_i32 : i32, i32, i32
  }
}

</mosaic_0001>

<llo_original>
// kernel: tpu_custom_call.1
$region0: #{tpu_custom_call.1}
  #allocation0 [shape = 'u32[]', space=smem, size = 0x4, offset = 0x4, fixed_abs, tag = 'smem constant byte address 0x4 - core index']
  #allocation1 [shape = 'u32[144,128]{1,0:T(1,128)}', space=vmem, size = 0x12000, scoped, tag = 'internal scratch']
  %s0 = inlined_call_operand.hbm [shape: bf16[128,128], index: 0, kind: input, shape index: {}]
  %s1 = inlined_call_operand.hbm [shape: bf16[2,128,128], index: 1, kind: input, shape index: {}]
  %s2 = inlined_call_operand.hbm [shape: f32[2,128,128], index: 2, kind: output, shape index: {}]
  %s3 = sld [smem:[#allocation0]]
  $region30: #{tpu_custom_call.1} parent=0
    _
  %s5 = ssub.s32 1, %s3
  %s6 = scalar_select 0, %s5, %s3
  $region1: #{tpu_custom_call.1} parent=0
    #allocation2 [shape = 'u8[32768]{0}', space=vmem, size = 0x8000, scoped, tag = 'input window, operand 0, single buffered']
    #allocation3 [shape = 's32[1]{0}', space=sflag, size = 0x4, scoped, tag = 'scoped memory for tpu_custom_call.1']
    #allocation4 [shape = 's32[1]{0}', space=sflag, size = 0x4, scoped, tag = 'scoped memory for tpu_custom_call.1']
    #allocation5 [shape = 'u8[65536]{0}', space=vmem, size = 0x10000, scoped, tag = 'input window, operand 1, single buffered']
    #allocation6 [shape = 's32[1]{0}', space=sflag, size = 0x4, scoped, tag = 'scoped memory for tpu_custom_call.1']
    #allocation7 [shape = 'u8[131072]{0}', space=vmem, size = 0x20000, scoped, tag = 'output window, operand 0, single buffered']
    %7 = vsyncpa [#allocation3], 0
    %8 = vsyncpa [#allocation6], 0
    %9 = vsyncpa [#allocation4], 0
    // Predicated region
    $region2: #{tpu_custom_call.1} parent=1 // pred_check
      _
    $region3: #{tpu_custom_call.1} parent=1 // pred_check_branch
      %11 = sbr.rel (0) target = $region5
    $region4: #{tpu_custom_call.1} parent=1 // pred_region
      %s13 = ssub.s32 1024, 1024
      %14 = vsyncadd [#allocation3], %s13
      %s15 = sshll.u32 [#allocation2], 4
      %s16 = int_to_ptr.vmem [resolvable:$true] %s15
      %21 = dma.hbm_to_vmem [thread:$0]  %s0, 1024, %s16, [#allocation3], 64, 64, 4
    $region5: #{tpu_custom_call.1} parent=1 // pred_fallthru
      _
    // Predicated region
    $region6: #{tpu_custom_call.1} parent=1 // pred_check
      _
    $region7: #{tpu_custom_call.1} parent=1 // pred_check_branch
      %23 = sbr.rel (0) target = $region9
    $region8: #{tpu_custom_call.1} parent=1 // pred_region
      %s25 = ssub.s32 2048, 2048
      %26 = vsyncadd [#allocation6], %s25
      %s27 = sshll.u32 [#allocation5], 4
      %s28 = int_to_ptr.vmem [resolvable:$true] %s27
      %33 = dma.hbm_to_vmem [thread:$0]  %s1, 2048, %s28, [#allocation6], 64, 64, 4
    $region9: #{tpu_custom_call.1} parent=1 // pred_fallthru
      _
    // Predicated region
    $region10: #{tpu_custom_call.1} parent=1 // pred_check
      _
    $region11: #{tpu_custom_call.1} parent=1 // pred_check_branch
      %35 = sbr.rel (0) target = $region13
    $region12: #{tpu_custom_call.1} parent=1 // pred_region
      %36 = dma.done [#allocation3], 1024
    $region13: #{tpu_custom_call.1} parent=1 // pred_fallthru
      _
    // Predicated region
    $region14: #{tpu_custom_call.1} parent=1 // pred_check
      _
    $region15: #{tpu_custom_call.1} parent=1 // pred_check_branch
      %38 = sbr.rel (0) target = $region17
    $region16: #{tpu_custom_call.1} parent=1 // pred_region
      %39 = dma.done [#allocation6], 2048
    $region17: #{tpu_custom_call.1} parent=1 // pred_fallthru
      _
    %p41 = scmp.eq.s32.totalorder 0, 0
    // Predicated region
    $region18: #{tpu_custom_call.1} parent=1 // pred_check
      %p42 = pneg %p41
    $region19: #{tpu_custom_call.1} parent=1 // pred_check_branch
      %44 = sbr.rel (%p42) target = $region21
    $region20: #{tpu_custom_call.1} parent=1 // pred_region
      %45 = vst [vmem:[#allocation7] sm:$0xff] 0.0
      %46 = vst [vmem:[#allocation7 + $0x8] sm:$0xff] 0.0
      %47 = vst [vmem:[#allocation7 + $0x10] sm:$0xff] 0.0
      %48 = vst [vmem:[#allocation7 + $0x18] sm:$0xff] 0.0
      %49 = vst [vmem:[#allocation7 + $0x20] sm:$0xff] 0.0
      %50 = vst [vmem:[#allocation7 + $0x28] sm:$0xff] 0.0
      %51 = vst [vmem:[#allocation7 + $0x30] sm:$0xff] 0.0
      %52 = vst [vmem:[#allocation7 + $0x38] sm:$0xff] 0.0
      %53 = vst [vmem:[#allocation7 + $0x40] sm:$0xff] 0.0
      %54 = vst [vmem:[#allocation7 + $0x48] sm:$0xff] 0.0
      %55 = vst [vmem:[#allocation7 + $0x50] sm:$0xff] 0.0
      %56 = vst [vmem:[#allocation7 + $0x58] sm:$0xff] 0.0
      %57 = vst [vmem:[#allocation7 + $0x60] sm:$0xff] 0.0
      %58 = vst [vmem:[#allocation7 + $0x68] sm:$0xff] 0.0
      %59 = vst [vmem:[#allocation7 + $0x70] sm:$0xff] 0.0
      %60 = vst [vmem:[#allocation7 + $0x78] sm:$0xff] 0.0
      %61 = vst [vmem:[#allocation7 + $0x80] sm:$0xff] 0.0
      %62 = vst [vmem:[#allocation7 + $0x88] sm:$0xff] 0.0
      %63 = vst [vmem:[#allocation7 + $0x90] sm:$0xff] 0.0
      %64 = vst [vmem:[#allocation7 + $0x98] sm:$0xff] 0.0
      %65 = vst [vmem:[#allocation7 + $0xa0] sm:$0xff] 0.0
      %66 = vst [vmem:[#allocation7 + $0xa8] sm:$0xff] 0.0
      %67 = vst [vmem:[#allocation7 + $0xb0] sm:$0xff] 0.0
      %68 = vst [vmem:[#allocation7 + $0xb8] sm:$0xff] 0.0
      %69 = vst [vmem:[#allocation7 + $0xc0] sm:$0xff] 0.0
      %70 = vst [vmem:[#allocation7 + $0xc8] sm:$0xff] 0.0
      %71 = vst [vmem:[#allocation7 + $0xd0] sm:$0xff] 0.0
      %72 = vst [vmem:[#allocation7 + $0xd8] sm:$0xff] 0.0
      %73 = vst [vmem:[#allocation7 + $0xe0] sm:$0xff] 0.0
      %74 = vst [vmem:[#allocation7 + $0xe8] sm:$0xff] 0.0
      %75 = vst [vmem:[#allocation7 + $0xf0] sm:$0xff] 0.0
      %76 = vst [vmem:[#allocation7 + $0xf8] sm:$0xff] 0.0
    $region21: #{tpu_custom_call.1} parent=1 // pred_fallthru
      _
    %v77 = vld [vmem:[#allocation2] sm:$0xf]
    %v78 = vld [vmem:[#allocation2 + $0x4] sm:$0xf]
    %v79 = vld [vmem:[#allocation2 + $0x8] sm:$0xf]
    %v80 = vld [vmem:[#allocation2 + $0xc] sm:$0xf]
    %v81 = vld [vmem:[#allocation2 + $0x10] sm:$0xf]
    %v82 = vld [vmem:[#allocation2 + $0x14] sm:$0xf]
    %v83 = vld [vmem:[#allocation2 + $0x18] sm:$0xf]
    %v84 = vld [vmem:[#allocation2 + $0x1c] sm:$0xf]
    %v85 = vld [vmem:[#allocation2 + $0x20] sm:$0xf]
    %v86 = vld [vmem:[#allocation2 + $0x24] sm:$0xf]
    %v87 = vld [vmem:[#allocation2 + $0x28] sm:$0xf]
    %v88 = vld [vmem:[#allocation2 + $0x2c] sm:$0xf]
    %v89 = vld [vmem:[#allocation2 + $0x30] sm:$0xf]
    %v90 = vld [vmem:[#allocation2 + $0x34] sm:$0xf]
    %v91 = vld [vmem:[#allocation2 + $0x38] sm:$0xf]
    %v92 = vld [vmem:[#allocation2 + $0x3c] sm:$0xf]
    %v93 = vld [vmem:[#allocation7] sm:$0xff]
    %v94 = vld [vmem:[#allocation7 + $0x8] sm:$0xff]
    %v95 = vld [vmem:[#allocation7 + $0x10] sm:$0xff]
    %v96 = vld [vmem:[#allocation7 + $0x18] sm:$0xff]
    %v97 = vld [vmem:[#allocation7 + $0x20] sm:$0xff]
    %v98 = vld [vmem:[#allocation7 + $0x28] sm:$0xff]
    %v99 = vld [vmem:[#allocation7 + $0x30] sm:$0xff]
    %v100 = vld [vmem:[#allocation7 + $0x38] sm:$0xff]
    %v101 = vld [vmem:[#allocation7 + $0x40] sm:$0xff]
    %v102 = vld [vmem:[#allocation7 + $0x48] sm:$0xff]
    %v103 = vld [vmem:[#allocation7 + $0x50] sm:$0xff]
    %v104 = vld [vmem:[#allocation7 + $0x58] sm:$0xff]
    %v105 = vld [vmem:[#allocation7 + $0x60] sm:$0xff]
    %v106 = vld [vmem:[#allocation7 + $0x68] sm:$0xff]
    %v107 = vld [vmem:[#allocation7 + $0x70] sm:$0xff]
    %v108 = vld [vmem:[#allocation7 + $0x78] sm:$0xff]
    %v109 = vld [vmem:[#allocation5] sm:$0xf]
    %v110 = vld [vmem:[#allocation5 + $0x4] sm:$0xf]
    %v111 = vld [vmem:[#allocation5 + $0x8] sm:$0xf]
    %v112 = vld [vmem:[#allocation5 + $0xc] sm:$0xf]
    %v113 = vld [vmem:[#allocation5 + $0x10] sm:$0xf]
    %v114 = vld [vmem:[#allocation5 + $0x14] sm:$0xf]
    %v115 = vld [vmem:[#allocation5 + $0x18] sm:$0xf]
    %v116 = vld [vmem:[#allocation5 + $0x1c] sm:$0xf]
    %v117 = vld [vmem:[#allocation5 + $0x20] sm:$0xf]
    %v118 = vld [vmem:[#allocation5 + $0x24] sm:$0xf]
    %v119 = vld [vmem:[#allocation5 + $0x28] sm:$0xf]
    %v120 = vld [vmem:[#allocation5 + $0x2c] sm:$0xf]
    %v121 = vld [vmem:[#allocation5 + $0x30] sm:$0xf]
    %v122 = vld [vmem:[#allocation5 + $0x34] sm:$0xf]
    %v123 = vld [vmem:[#allocation5 + $0x38] sm:$0xf]
    %v124 = vld [vmem:[#allocation5 + $0x3c] sm:$0xf]
    %v141 = vunpack.c.l.b16 %v77
    %v142 = vunpack.c.l.b16 %v78
    %v143 = vunpack.c.l.b16 %v79
    %v144 = vunpack.c.l.b16 %v80
    %v145 = vunpack.c.l.b16 %v81
    %v146 = vunpack.c.l.b16 %v82
    %v147 = vunpack.c.l.b16 %v83
    %v148 = vunpack.c.l.b16 %v84
    %v149 = vunpack.c.l.b16 %v85
    %v150 = vunpack.c.l.b16 %v86
    %v151 = vunpack.c.l.b16 %v87
    %v152 = vunpack.c.l.b16 %v88
    %v153 = vunpack.c.l.b16 %v89
    %v154 = vunpack.c.l.b16 %v90
    %v155 = vunpack.c.l.b16 %v91
    %v156 = vunpack.c.l.b16 %v92
    %v157 = vpack.c.b16 %v142, %v141
    %v158 = vpack.c.b16 %v144, %v143
    %v159 = vpack.c.b16 %v146, %v145
    %v160 = vpack.c.b16 %v148, %v147
    %v161 = vpack.c.b16 %v150, %v149
    %v162 = vpack.c.b16 %v152, %v151
    %v163 = vpack.c.b16 %v154, %v153
    %v164 = vpack.c.b16 %v156, %v155
    %v189 = vunpack.c.l.b16 %v109
    %v190 = vunpack.c.l.b16 %v110
    %v191 = vunpack.c.l.b16 %v111
    %v192 = vunpack.c.l.b16 %v112
    %v193 = vunpack.c.l.b16 %v113
    %v194 = vunpack.c.l.b16 %v114
    %v195 = vunpack.c.l.b16 %v115
    %v196 = vunpack.c.l.b16 %v116
    %v197 = vunpack.c.l.b16 %v117
    %v198 = vunpack.c.l.b16 %v118
    %v199 = vunpack.c.l.b16 %v119
    %v200 = vunpack.c.l.b16 %v120
    %v201 = vunpack.c.l.b16 %v121
    %v202 = vunpack.c.l.b16 %v122
    %v203 = vunpack.c.l.b16 %v123
    %v204 = vunpack.c.l.b16 %v124
    %v205 = vpack.c.b16 %v190, %v189
    %v206 = vpack.c.b16 %v192, %v191
    %v207 = vpack.c.b16 %v194, %v193
    %v208 = vpack.c.b16 %v196, %v195
    %v209 = vpack.c.b16 %v198, %v197
    %v210 = vpack.c.b16 %v200, %v199
    %v211 = vpack.c.b16 %v202, %v201
    %v212 = vpack.c.b16 %v204, %v203
    %221 = vmatprep.subr.bf16.mxu0 0
    %222 = vmatpush1.bf16.msra.mxu0 %v212
    %223 = vmatprep.subr.bf16.mxu0 0
    %224 = vmatpush1.bf16.msra.mxu0 %v211
    %225 = vmatprep.subr.bf16.mxu0 0
    %226 = vmatpush1.bf16.msra.mxu0 %v210
    %227 = vmatprep.subr.bf16.mxu0 0
    %228 = vmatpush1.bf16.msra.mxu0 %v209
    %229 = vmatprep.subr.bf16.mxu0 0
    %230 = vmatpush1.bf16.msra.mxu0 %v208
    %231 = vmatprep.subr.bf16.mxu0 0
    %232 = vmatpush1.bf16.msra.mxu0 %v207
    %233 = vmatprep.subr.bf16.mxu0 0
    %234 = vmatpush1.bf16.msra.mxu0 %v206
    %235 = vmatprep.subr.bf16.mxu0 0
    %236 = vmatpush1.bf16.msra.mxu0 %v205
    %237 = vmatprep.subr.bf16.mxu0 0
    %238 = vmatpush2.bf16.msra.mxu0 0
    %239 = vmatprep.subr.bf16.mxu0 0
    %240 = vmatpush2.bf16.msra.mxu0 0
    %241 = vmatprep.subr.bf16.mxu0 0
    %242 = vmatpush2.bf16.msra.mxu0 0
    %243 = vmatprep.subr.bf16.mxu0 0
    %244 = vmatpush2.bf16.msra.mxu0 0
    %245 = vmatprep.subr.bf16.mxu0 0
    %246 = vmatpush2.bf16.msra.mxu0 0
    %247 = vmatprep.subr.bf16.mxu0 0
    %248 = vmatpush2.bf16.msra.mxu0 0
    %249 = vmatprep.subr.bf16.mxu0 0
    %250 = vmatpush2.bf16.msra.mxu0 0
    %251 = vmatprep.subr.bf16.mxu0 0
    %252 = vmatpush2.bf16.msra.mxu0 0
    %253 = vmatprep.mubr.bf16.mxu0 0
    %254 = vmatmul.mubr.bf16.gmra.mxu0 %v157
    %v255 = vpop.f32.mrf.mxu0
    %v256 = vadd.f32 0.0, %v255
    %v257 = vpop.f32.mrf.mxu0
    %v258 = vpop.f32.mrf.mxu0
    %v259 = vadd.f32 0.0, %v258
    %v260 = vpop.f32.mrf.mxu0
    %261 = vmatprep.mubr.bf16.mxu0 0
    %262 = vmatmul.mubr.bf16.gmra.mxu0 %v158
    %v263 = vpop.f32.mrf.mxu0
    %v264 = vadd.f32 0.0, %v263
    %v265 = vpop.f32.mrf.mxu0
    %v266 = vpop.f32.mrf.mxu0
    %v267 = vadd.f32 0.0, %v266
    %v268 = vpop.f32.mrf.mxu0
    %269 = vmatprep.mubr.bf16.mxu0 0
    %270 = vmatmul.mubr.bf16.gmra.mxu0 %v159
    %v271 = vpop.f32.mrf.mxu0
    %v272 = vadd.f32 0.0, %v271
    %v273 = vpop.f32.mrf.mxu0
    %v274 = vpop.f32.mrf.mxu0
    %v275 = vadd.f32 0.0, %v274
    %v276 = vpop.f32.mrf.mxu0
    %277 = vmatprep.mubr.bf16.mxu0 0
    %278 = vmatmul.mubr.bf16.gmra.mxu0 %v160
    %v279 = vpop.f32.mrf.mxu0
    %v280 = vadd.f32 0.0, %v279
    %v281 = vpop.f32.mrf.mxu0
    %v282 = vpop.f32.mrf.mxu0
    %v283 = vadd.f32 0.0, %v282
    %v284 = vpop.f32.mrf.mxu0
    %285 = vmatprep.mubr.bf16.mxu0 0
    %286 = vmatmul.mubr.bf16.gmra.mxu0 %v161
    %v287 = vpop.f32.mrf.mxu0
    %v288 = vadd.f32 0.0, %v287
    %v289 = vpop.f32.mrf.mxu0
    %v290 = vpop.f32.mrf.mxu0
    %v291 = vadd.f32 0.0, %v290
    %v292 = vpop.f32.mrf.mxu0
    %293 = vmatprep.mubr.bf16.mxu0 0
    %294 = vmatmul.mubr.bf16.gmra.mxu0 %v162
    %v295 = vpop.f32.mrf.mxu0
    %v296 = vadd.f32 0.0, %v295
    %v297 = vpop.f32.mrf.mxu0
    %v298 = vpop.f32.mrf.mxu0
    %v299 = vadd.f32 0.0, %v298
    %v300 = vpop.f32.mrf.mxu0
    %301 = vmatprep.mubr.bf16.mxu0 0
    %302 = vmatmul.mubr.bf16.gmra.mxu0 %v163
    %v303 = vpop.f32.mrf.mxu0
    %v304 = vadd.f32 0.0, %v303
    %v305 = vpop.f32.mrf.mxu0
    %v306 = vpop.f32.mrf.mxu0
    %v307 = vadd.f32 0.0, %v306
    %v308 = vpop.f32.mrf.mxu0
    %309 = vmatprep.mubr.bf16.mxu0 0
    %310 = vmatmul.mubr.bf16.gmra.mxu0 %v164
    %v311 = vpop.f32.mrf.mxu0
    %v312 = vadd.f32 0.0, %v311
    %v313 = vpop.f32.mrf.mxu0
    %v314 = vpop.f32.mrf.mxu0
    %v315 = vadd.f32 0.0, %v314
    %v316 = vpop.f32.mrf.mxu0
    %317 = vdwg.mxu0
    %v318 = vadd.f32 %v93, %v256
    %v319 = vadd.f32 %v94, %v259
    %v320 = vadd.f32 %v95, %v264
    %v321 = vadd.f32 %v96, %v267
    %v322 = vadd.f32 %v97, %v272
    %v323 = vadd.f32 %v98, %v275
    %v324 = vadd.f32 %v99, %v280
    %v325 = vadd.f32 %v100, %v283
    %v326 = vadd.f32 %v101, %v288
    %v327 = vadd.f32 %v102, %v291
    %v328 = vadd.f32 %v103, %v296
    %v329 = vadd.f32 %v104, %v299
    %v330 = vadd.f32 %v105, %v304
    %v331 = vadd.f32 %v106, %v307
    %v332 = vadd.f32 %v107, %v312
    %v333 = vadd.f32 %v108, %v315
    %334 = vst [vmem:[#allocation7] sm:$0xff] %v318
    %335 = vst [vmem:[#allocation7 + $0x8] sm:$0xff] %v319
    %336 = vst [vmem:[#allocation7 + $0x10] sm:$0xff] %v320
    %337 = vst [vmem:[#allocation7 + $0x18] sm:$0xff] %v321
    %338 = vst [vmem:[#allocation7 + $0x20] sm:$0xff] %v322
    %339 = vst [vmem:[#allocation7 + $0x28] sm:$0xff] %v323
    %340 = vst [vmem:[#allocation7 + $0x30] sm:$0xff] %v324
    %341 = vst [vmem:[#allocation7 + $0x38] sm:$0xff] %v325
    %342 = vst [vmem:[#allocation7 + $0x40] sm:$0xff] %v326
    %343 = vst [vmem:[#allocation7 + $0x48] sm:$0xff] %v327
    %344 = vst [vmem:[#allocation7 + $0x50] sm:$0xff] %v328
    %345 = vst [vmem:[#allocation7 + $0x58] sm:$0xff] %v329
    %346 = vst [vmem:[#allocation7 + $0x60] sm:$0xff] %v330
    %347 = vst [vmem:[#allocation7 + $0x68] sm:$0xff] %v331
    %348 = vst [vmem:[#allocation7 + $0x70] sm:$0xff] %v332
    %349 = vst [vmem:[#allocation7 + $0x78] sm:$0xff] %v333
    %s350 = scalar_lea.vmem [#allocation7], 128
    %v351 = vld [vmem:[%s350] sm:$0xff]
    %v352 = vld [vmem:[%s350 + $0x8] sm:$0xff]
    %v353 = vld [vmem:[%s350 + $0x10] sm:$0xff]
    %v354 = vld [vmem:[%s350 + $0x18] sm:$0xff]
    %v355 = vld [vmem:[%s350 + $0x20] sm:$0xff]
    %v356 = vld [vmem:[%s350 + $0x28] sm:$0xff]
    %v357 = vld [vmem:[%s350 + $0x30] sm:$0xff]
    %v358 = vld [vmem:[%s350 + $0x38] sm:$0xff]
    %v359 = vld [vmem:[%s350 + $0x40] sm:$0xff]
    %v360 = vld [vmem:[%s350 + $0x48] sm:$0xff]
    %v361 = vld [vmem:[%s350 + $0x50] sm:$0xff]
    %v362 = vld [vmem:[%s350 + $0x58] sm:$0xff]
    %v363 = vld [vmem:[%s350 + $0x60] sm:$0xff]
    %v364 = vld [vmem:[%s350 + $0x68] sm:$0xff]
    %v365 = vld [vmem:[%s350 + $0x70] sm:$0xff]
    %v366 = vld [vmem:[%s350 + $0x78] sm:$0xff]
    %s367 = scalar_lea.vmem [#allocation5], 64
    %v368 = vld [vmem:[%s367] sm:$0xf]
    %v369 = vld [vmem:[%s367 + $0x4] sm:$0xf]
    %v370 = vld [vmem:[%s367 + $0x8] sm:$0xf]
    %v371 = vld [vmem:[%s367 + $0xc] sm:$0xf]
    %v372 = vld [vmem:[%s367 + $0x10] sm:$0xf]
    %v373 = vld [vmem:[%s367 + $0x14] sm:$0xf]
    %v374 = vld [vmem:[%s367 + $0x18] sm:$0xf]
    %v375 = vld [vmem:[%s367 + $0x1c] sm:$0xf]
    %v376 = vld [vmem:[%s367 + $0x20] sm:$0xf]
    %v377 = vld [vmem:[%s367 + $0x24] sm:$0xf]
    %v378 = vld [vmem:[%s367 + $0x28] sm:$0xf]
    %v379 = vld [vmem:[%s367 + $0x2c] sm:$0xf]
    %v380 = vld [vmem:[%s367 + $0x30] sm:$0xf]
    %v381 = vld [vmem:[%s367 + $0x34] sm:$0xf]
    %v382 = vld [vmem:[%s367 + $0x38] sm:$0xf]
    %v383 = vld [vmem:[%s367 + $0x3c] sm:$0xf]
    %v400 = vunpack.c.l.b16 %v368
    %v401 = vunpack.c.l.b16 %v369
    %v402 = vunpack.c.l.b16 %v370
    %v403 = vunpack.c.l.b16 %v371
    %v404 = vunpack.c.l.b16 %v372
    %v405 = vunpack.c.l.b16 %v373
    %v406 = vunpack.c.l.b16 %v374
    %v407 = vunpack.c.l.b16 %v375
    %v408 = vunpack.c.l.b16 %v376
    %v409 = vunpack.c.l.b16 %v377
    %v410 = vunpack.c.l.b16 %v378
    %v411 = vunpack.c.l.b16 %v379
    %v412 = vunpack.c.l.b16 %v380
    %v413 = vunpack.c.l.b16 %v381
    %v414 = vunpack.c.l.b16 %v382
    %v415 = vunpack.c.l.b16 %v383
    %v416 = vpack.c.b16 %v401, %v400
    %v417 = vpack.c.b16 %v403, %v402
    %v418 = vpack.c.b16 %v405, %v404
    %v419 = vpack.c.b16 %v407, %v406
    %v420 = vpack.c.b16 %v409, %v408
    %v421 = vpack.c.b16 %v411, %v410
    %v422 = vpack.c.b16 %v413, %v412
    %v423 = vpack.c.b16 %v415, %v414
    %432 = vmatprep.subr.bf16.mxu0 0
    %433 = vmatpush1.bf16.msra.mxu0 %v423
    %434 = vmatprep.subr.bf16.mxu0 0
    %435 = vmatpush1.bf16.msra.mxu0 %v422
    %436 = vmatprep.subr.bf16.mxu0 0
    %437 = vmatpush1.bf16.msra.mxu0 %v421
    %438 = vmatprep.subr.bf16.mxu0 0
    %439 = vmatpush1.bf16.msra.mxu0 %v420
    %440 = vmatprep.subr.bf16.mxu0 0
    %441 = vmatpush1.bf16.msra.mxu0 %v419
    %442 = vmatprep.subr.bf16.mxu0 0
    %443 = vmatpush1.bf16.msra.mxu0 %v418
    %444 = vmatprep.subr.bf16.mxu0 0
    %445 = vmatpush1.bf16.msra.mxu0 %v417
    %446 = vmatprep.subr.bf16.mxu0 0
    %447 = vmatpush1.bf16.msra.mxu0 %v416
    %448 = vmatprep.subr.bf16.mxu0 0
    %449 = vmatpush2.bf16.msra.mxu0 0
    %450 = vmatprep.subr.bf16.mxu0 0
    %451 = vmatpush2.bf16.msra.mxu0 0
    %452 = vmatprep.subr.bf16.mxu0 0
    %453 = vmatpush2.bf16.msra.mxu0 0
    %454 = vmatprep.subr.bf16.mxu0 0
    %455 = vmatpush2.bf16.msra.mxu0 0
    %456 = vmatprep.subr.bf16.mxu0 0
    %457 = vmatpush2.bf16.msra.mxu0 0
    %458 = vmatprep.subr.bf16.mxu0 0
    %459 = vmatpush2.bf16.msra.mxu0 0
    %460 = vmatprep.subr.bf16.mxu0 0
    %461 = vmatpush2.bf16.msra.mxu0 0
    %462 = vmatprep.subr.bf16.mxu0 0
    %463 = vmatpush2.bf16.msra.mxu0 0
    %464 = vmatprep.mubr.bf16.mxu0 0
    %465 = vmatmul.mubr.bf16.gmra.mxu0 %v157
    %v466 = vpop.f32.mrf.mxu0
    %v467 = vadd.f32 0.0, %v466
    %v468 = vpop.f32.mrf.mxu0
    %v469 = vpop.f32.mrf.mxu0
    %v470 = vadd.f32 0.0, %v469
    %v471 = vpop.f32.mrf.mxu0
    %472 = vmatprep.mubr.bf16.mxu0 0
    %473 = vmatmul.mubr.bf16.gmra.mxu0 %v158
    %v474 = vpop.f32.mrf.mxu0
    %v475 = vadd.f32 0.0, %v474
    %v476 = vpop.f32.mrf.mxu0
    %v477 = vpop.f32.mrf.mxu0
    %v478 = vadd.f32 0.0, %v477
    %v479 = vpop.f32.mrf.mxu0
    %480 = vmatprep.mubr.bf16.mxu0 0
    %481 = vmatmul.mubr.bf16.gmra.mxu0 %v159
    %v482 = vpop.f32.mrf.mxu0
    %v483 = vadd.f32 0.0, %v482
    %v484 = vpop.f32.mrf.mxu0
    %v485 = vpop.f32.mrf.mxu0
    %v486 = vadd.f32 0.0, %v485
    %v487 = vpop.f32.mrf.mxu0
    %488 = vmatprep.mubr.bf16.mxu0 0
    %489 = vmatmul.mubr.bf16.gmra.mxu0 %v160
    %v490 = vpop.f32.mrf.mxu0
    %v491 = vadd.f32 0.0, %v490
    %v492 = vpop.f32.mrf.mxu0
    %v493 = vpop.f32.mrf.mxu0
    %v494 = vadd.f32 0.0, %v493
    %v495 = vpop.f32.mrf.mxu0
    %496 = vmatprep.mubr.bf16.mxu0 0
    %497 = vmatmul.mubr.bf16.gmra.mxu0 %v161
    %v498 = vpop.f32.mrf.mxu0
    %v499 = vadd.f32 0.0, %v498
    %v500 = vpop.f32.mrf.mxu0
    %v501 = vpop.f32.mrf.mxu0
    %v502 = vadd.f32 0.0, %v501
    %v503 = vpop.f32.mrf.mxu0
    %504 = vmatprep.mubr.bf16.mxu0 0
    %505 = vmatmul.mubr.bf16.gmra.mxu0 %v162
    %v506 = vpop.f32.mrf.mxu0
    %v507 = vadd.f32 0.0, %v506
    %v508 = vpop.f32.mrf.mxu0
    %v509 = vpop.f32.mrf.mxu0
    %v510 = vadd.f32 0.0, %v509
    %v511 = vpop.f32.mrf.mxu0
    %512 = vmatprep.mubr.bf16.mxu0 0
    %513 = vmatmul.mubr.bf16.gmra.mxu0 %v163
    %v514 = vpop.f32.mrf.mxu0
    %v515 = vadd.f32 0.0, %v514
    %v516 = vpop.f32.mrf.mxu0
    %v517 = vpop.f32.mrf.mxu0
    %v518 = vadd.f32 0.0, %v517
    %v519 = vpop.f32.mrf.mxu0
    %520 = vmatprep.mubr.bf16.mxu0 0
    %521 = vmatmul.mubr.bf16.gmra.mxu0 %v164
    %v522 = vpop.f32.mrf.mxu0
    %v523 = vadd.f32 0.0, %v522
    %v524 = vpop.f32.mrf.mxu0
    %v525 = vpop.f32.mrf.mxu0
    %v526 = vadd.f32 0.0, %v525
    %v527 = vpop.f32.mrf.mxu0
    %528 = vdwg.mxu0
    %v529 = vadd.f32 %v351, %v467
    %v530 = vadd.f32 %v352, %v470
    %v531 = vadd.f32 %v353, %v475
    %v532 = vadd.f32 %v354, %v478
    %v533 = vadd.f32 %v355, %v483
    %v534 = vadd.f32 %v356, %v486
    %v535 = vadd.f32 %v357, %v491
    %v536 = vadd.f32 %v358, %v494
    %v537 = vadd.f32 %v359, %v499
    %v538 = vadd.f32 %v360, %v502
    %v539 = vadd.f32 %v361, %v507
    %v540 = vadd.f32 %v362, %v510
    %v541 = vadd.f32 %v363, %v515
    %v542 = vadd.f32 %v364, %v518
    %v543 = vadd.f32 %v365, %v523
    %v544 = vadd.f32 %v366, %v526
    %545 = vst [vmem:[%s350] sm:$0xff] %v529
    %546 = vst [vmem:[%s350 + $0x8] sm:$0xff] %v530
    %547 = vst [vmem:[%s350 + $0x10] sm:$0xff] %v531
    %548 = vst [vmem:[%s350 + $0x18] sm:$0xff] %v532
    %549 = vst [vmem:[%s350 + $0x20] sm:$0xff] %v533
    %550 = vst [vmem:[%s350 + $0x28] sm:$0xff] %v534
    %551 = vst [vmem:[%s350 + $0x30] sm:$0xff] %v535
    %552 = vst [vmem:[%s350 + $0x38] sm:$0xff] %v536
    %553 = vst [vmem:[%s350 + $0x40] sm:$0xff] %v537
    %554 = vst [vmem:[%s350 + $0x48] sm:$0xff] %v538
    %555 = vst [vmem:[%s350 + $0x50] sm:$0xff] %v539
    %556 = vst [vmem:[%s350 + $0x58] sm:$0xff] %v540
    %557 = vst [vmem:[%s350 + $0x60] sm:$0xff] %v541
    %558 = vst [vmem:[%s350 + $0x68] sm:$0xff] %v542
    %559 = vst [vmem:[%s350 + $0x70] sm:$0xff] %v543
    %560 = vst [vmem:[%s350 + $0x78] sm:$0xff] %v544
    // Predicated region
    $region22: #{tpu_custom_call.1} parent=1 // pred_check
      _
    $region23: #{tpu_custom_call.1} parent=1 // pred_check_branch
      %562 = sbr.rel (0) target = $region25
    $region24: #{tpu_custom_call.1} parent=1 // pred_region
      %s564 = ssub.s32 4096, 4096
      %565 = vsyncadd [#allocation4], %s564
      %s566 = sshll.u32 [#allocation7], 4
      %s567 = int_to_ptr.vmem [resolvable:$true] %s566
      %572 = dma.vmem_to_hbm [thread:$0]  %s567, 4096, %s2, [#allocation4], 128, 128, 8
    $region25: #{tpu_custom_call.1} parent=1 // pred_fallthru
      _
    // Predicated region
    $region26: #{tpu_custom_call.1} parent=1 // pred_check
      _
    $region27: #{tpu_custom_call.1} parent=1 // pred_check_branch
      %574 = sbr.rel (0) target = $region29
    $region28: #{tpu_custom_call.1} parent=1 // pred_region
      %575 = dma.done [#allocation4], 4096
    $region29: #{tpu_custom_call.1} parent=1 // pred_fallthru
      _
    %576 = vsyncpa [#allocation3], 1
    %577 = vsyncpa [#allocation6], 1
    %578 = vsyncpa [#allocation4], 1

</llo_original>
